<compile_context>
chip_gen: v7x
topology: tpu7x:2x2x1
jax: 0.10.0
libtpu: 0.0.40
codegen_flags: <defaults>
</compile_context>

<pallas_src>
import functools

import jax
import jax.numpy as jnp
from jax.experimental import pallas as pl
from jax.experimental.pallas import tpu as pltpu

LANE = 128      # TPU lane width (last dim)
SUBLANE = 8     # TPU sublane width (second-to-last dim)


def _round_up(x: int, m: int) -> int:
    return ((x + m - 1) // m) * m


# --------------------------------- kernel -----------------------------------

def _ae_fused_kernel(x_ref, *rest, num_encoder: int, num_decoder: int):
    """Fused AE forward for one batch tile.

    rest = (W_0, b_0, W_1, b_1, ..., W_{L-1}, b_{L-1}, out_ref).
    All weights / biases are already zero-padded to lane-dense shapes and are
    VMEM-resident; the activation chain lives entirely in vregs/VMEM.
    """
    o_ref = rest[-1]
    wb = rest[:-1]

    h = x_ref[...]
    if h.dtype != jnp.float32:
        h = h.astype(jnp.float32)   # keep elementwise math in f32 (v5e-friendly)

    idx = 0
    # Encoder: Linear -> ReLU
    for _ in range(num_encoder):
        w = wb[idx][...]
        b = wb[idx + 1][...]
        idx += 2
        h = jnp.dot(h, w, preferred_element_type=jnp.float32) + b
        h = jnp.maximum(h, 0.0)
    # Decoder: ReLU -> Linear (no trailing ReLU on the last layer)
    for _ in range(num_decoder):
        w = wb[idx][...]
        b = wb[idx + 1][...]
        idx += 2
        h = jnp.maximum(h, 0.0)
        h = jnp.dot(h, w, preferred_element_type=jnp.float32) + b

    o_ref[...] = h.astype(o_ref.dtype)


# ----------------------------- parameter setup ------------------------------

def init_ae_params(key, n_in, bottleneck, n_hidden_encoder, n_hidden_decoder=None,
                   dtype=jnp.float32):
    """Unpadded parameters, matching nn.Linear's U(-1/sqrt(fan_in), ...) init."""
    if n_hidden_decoder is None:
        n_hidden_decoder = n_hidden_encoder[::-1]

    enc_dims = [n_in] + list(n_hidden_encoder) + [bottleneck]
    dec_dims = [bottleneck] + list(n_hidden_decoder) + [n_in]

    def make_layers(key, dims):
        layers = []
        for din, dout in zip(dims[:-1], dims[1:]):
            key, kw, kb = jax.random.split(key, 3)
            bound = 1.0 / float(din) ** 0.5
            w = jax.random.uniform(kw, (din, dout), dtype, -bound, bound)
            b = jax.random.uniform(kb, (dout,), dtype, -bound, bound)
            layers.append((w, b))
        return key, layers

    key, enc_layers = make_layers(key, enc_dims)
    key, dec_layers = make_layers(key, dec_dims)
    return {"encoder": enc_layers, "decoder": dec_layers}


def prepare_ae_params(params, n_in, n_out):
    """One-time padding of weights/biases to lane-dense (multiple-of-128) shapes.

    Padded rows/cols/bias lanes are ZERO so padded lanes stay exactly zero
    through every Linear/ReLU; the wrapper slices the final output to n_out.
    For larger models, store the padded weights in bfloat16 here (accumulation
    stays f32 via preferred_element_type) to hit the v6e/v7x bf16 MXU rate and
    halve weight DMA traffic.
    """
    def pad_layer(w, b):
        din, dout = w.shape
        din_p = _round_up(din, LANE)
        dout_p = _round_up(dout, LANE)
        w_p = jnp.zeros((din_p, dout_p), w.dtype).at[:din, :dout].set(w)
        b_p = jnp.zeros((1, dout_p), b.dtype).at[0, :dout].set(b)
        return w_p, b_p

    enc = [pad_layer(w, b) for (w, b) in params["encoder"]]
    dec = [pad_layer(w, b) for (w, b) in params["decoder"]]
    return {"encoder": enc, "decoder": dec, "n_in": n_in, "n_out": n_out}


# ------------------------------- forward pass --------------------------------

def ae_forward(prepared, x, *, batch_tile=256):
    """Fused AE forward.  x: (B, n_in)  ->  (B, n_out)."""
    B, n_in = x.shape
    assert n_in == prepared["n_in"]
    n_out = prepared["n_out"]

    enc = prepared["encoder"]
    dec = prepared["decoder"]
    layers = enc + dec

    din_pad = enc[0][0].shape[0]      # padded input feature dim
    dout_pad = dec[-1][0].shape[1]    # padded output feature dim

    # Batch tile: big enough to pipeline, small enough that the
    # double-buffered (x + out) tiles + resident weights stay well under the
    # v7x 32 MiB scoped-VMEM default.  With 128-wide padded features a 256-row
    # tile is only ~256 KiB of double-buffered activation traffic per side.
    if B >= batch_tile:
        tb = batch_tile
    else:
        tb = max(SUBLANE, _round_up(B, SUBLANE))
    B_pad = _round_up(B, tb)
    grid = (B_pad // tb,)

    # Pad the input once per call (zeros in padded rows/lanes).
    if (B_pad, din_pad) != (B, n_in):
        x_pad = jnp.zeros((B_pad, din_pad), x.dtype).at[:B, :n_in].set(x)
    else:
        x_pad = x

    in_specs = [pl.BlockSpec((tb, din_pad), lambda i: (i, 0))]
    args = [x_pad]
    flops = 0
    bytes_accessed = x_pad.size * x_pad.dtype.itemsize
    for (w, b) in layers:
        # Weights/biases: whole array, identical block for every grid step
        # => resident in VMEM across the batch grid (no per-step DMA).
        in_specs.append(pl.BlockSpec(w.shape, lambda i: (0, 0)))
        in_specs.append(pl.BlockSpec(b.shape, lambda i: (0, 0)))
        args.append(w)
        args.append(b)
        flops += 2 * B_pad * w.shape[0] * w.shape[1]
        bytes_accessed += w.size * w.dtype.itemsize + b.size * b.dtype.itemsize
    bytes_accessed += B_pad * dout_pad * x.dtype.itemsize

    kernel = functools.partial(
        _ae_fused_kernel, num_encoder=len(enc), num_decoder=len(dec))

    out_pad = pl.pallas_call(
        kernel,
        out_shape=jax.ShapeDtypeStruct((B_pad, dout_pad), x.dtype),
        grid=grid,
        in_specs=in_specs,
        out_specs=pl.BlockSpec((tb, dout_pad), lambda i: (i, 0)),
        compiler_params=pltpu.CompilerParams(
            dimension_semantics=("parallel",)),   # batch shards across TCs on v7x
        cost_estimate=pl.CostEstimate(
            flops=flops, transcendentals=0, bytes_accessed=bytes_accessed),
    )(*args)

    return out_pad[:B, :n_out]


def ae_forward_ref(params, x):
    """Pure-JAX reference (unpadded params) for correctness checking."""
    h = x
    for (w, b) in params["encoder"]:
        h = jnp.maximum(h @ w + b, 0.0)
    for (w, b) in params["decoder"]:
        h = jnp.maximum(h, 0.0) @ w + b
    return h


if __name__ == "__main__":
    key = jax.random.PRNGKey(0)

    # Small shapes consistent with the module: x is (batch, n_in).
    batch = 8
    n_in = 32
    bottleneck = 8
    n_hidden_encoder = [24, 16]

    key, kx = jax.random.split(key)
    x = jax.random.normal(kx, (batch, n_in), jnp.float32)

    params = init_ae_params(key, n_in, bottleneck, n_hidden_encoder)
    prepared = prepare_ae_params(params, n_in=n_in, n_out=n_in)

    out = ae_forward(prepared, x)
    out = jax.block_until_ready(out)

    ref = ae_forward_ref(params, x)
    assert out.shape == (batch, n_in), out.shape
    assert jnp.allclose(out, ref, atol=1e-5, rtol=1e-5), "mismatch vs reference"

    print("KERNEL_OK")
</pallas_src>

<mosaic_0001>
module attributes {stable_mosaic.version = 11 : i64} {
  func.func @_ae_fused_kernel(%arg0: i32, %arg1: memref<8x128xf32, #tpu.memory_space<vmem>>, %arg2: memref<128x128xf32, #tpu.memory_space<vmem>>, %arg3: memref<1x128xf32, #tpu.memory_space<vmem>>, %arg4: memref<128x128xf32, #tpu.memory_space<vmem>>, %arg5: memref<1x128xf32, #tpu.memory_space<vmem>>, %arg6: memref<128x128xf32, #tpu.memory_space<vmem>>, %arg7: memref<1x128xf32, #tpu.memory_space<vmem>>, %arg8: memref<128x128xf32, #tpu.memory_space<vmem>>, %arg9: memref<1x128xf32, #tpu.memory_space<vmem>>, %arg10: memref<128x128xf32, #tpu.memory_space<vmem>>, %arg11: memref<1x128xf32, #tpu.memory_space<vmem>>, %arg12: memref<128x128xf32, #tpu.memory_space<vmem>>, %arg13: memref<1x128xf32, #tpu.memory_space<vmem>>, %arg14: memref<8x128xf32, #tpu.memory_space<vmem>>) attributes {dimension_semantics = [#tpu.dimension_semantics<parallel>], iteration_bounds = array<i64: 1>, scalar_prefetch = 0 : i64, scratch_operands = 0 : i64, tpu.core_type = #tpu.core_type<tc>, window_params = [{transform_indices = @transform_0, window_bounds = array<i64: 8, 128>}, {pipeline_mode = #tpu.pipeline_mode<synchronous>, transform_indices = @transform_1, window_bounds = array<i64: 128, 128>}, {pipeline_mode = #tpu.pipeline_mode<synchronous>, transform_indices = @transform_2, window_bounds = array<i64: 1, 128>}, {pipeline_mode = #tpu.pipeline_mode<synchronous>, transform_indices = @transform_3, window_bounds = array<i64: 128, 128>}, {pipeline_mode = #tpu.pipeline_mode<synchronous>, transform_indices = @transform_4, window_bounds = array<i64: 1, 128>}, {pipeline_mode = #tpu.pipeline_mode<synchronous>, transform_indices = @transform_5, window_bounds = array<i64: 128, 128>}, {pipeline_mode = #tpu.pipeline_mode<synchronous>, transform_indices = @transform_6, window_bounds = array<i64: 1, 128>}, {pipeline_mode = #tpu.pipeline_mode<synchronous>, transform_indices = @transform_7, window_bounds = array<i64: 128, 128>}, {pipeline_mode = #tpu.pipeline_mode<synchronous>, transform_indices = @transform_8, window_bounds = array<i64: 1, 128>}, {pipeline_mode = #tpu.pipeline_mode<synchronous>, transform_indices = @transform_9, window_bounds = array<i64: 128, 128>}, {pipeline_mode = #tpu.pipeline_mode<synchronous>, transform_indices = @transform_10, window_bounds = array<i64: 1, 128>}, {pipeline_mode = #tpu.pipeline_mode<synchronous>, transform_indices = @transform_11, window_bounds = array<i64: 128, 128>}, {pipeline_mode = #tpu.pipeline_mode<synchronous>, transform_indices = @transform_12, window_bounds = array<i64: 1, 128>}, {transform_indices = @transform_13, window_bounds = array<i64: 8, 128>}]} {
    %c0 = arith.constant 0 : index
    %c0_0 = arith.constant 0 : index
    %0 = vector.load %arg1[%c0, %c0_0] : memref<8x128xf32, #tpu.memory_space<vmem>>, vector<8x128xf32>
    %c0_1 = arith.constant 0 : index
    %c0_2 = arith.constant 0 : index
    %1 = vector.load %arg2[%c0_1, %c0_2] : memref<128x128xf32, #tpu.memory_space<vmem>>, vector<128x128xf32>
    %c0_3 = arith.constant 0 : index
    %c0_4 = arith.constant 0 : index
    %2 = vector.load %arg3[%c0_3, %c0_4] : memref<1x128xf32, #tpu.memory_space<vmem>>, vector<1x128xf32>
    %cst = arith.constant dense<0.000000e+00> : vector<8x128xf32>
    %3 = tpu.matmul %0, %1, %cst {dimension_numbers = #tpu.dot_dimension_numbers<[1], [0], [0], [1], [0, 0, 1, 1], [], []>} : vector<8x128xf32>, vector<128x128xf32>, vector<8x128xf32> -> vector<8x128xf32>
    %4 = vector.broadcast %2 : vector<1x128xf32> to vector<8x128xf32>
    %5 = arith.addf %3, %4 : vector<8x128xf32>
    %cst_5 = arith.constant 0.000000e+00 : f32
    %6 = vector.broadcast %cst_5 : f32 to vector<8x128xf32>
    %7 = arith.maximumf %5, %6 : vector<8x128xf32>
    %c0_6 = arith.constant 0 : index
    %c0_7 = arith.constant 0 : index
    %8 = vector.load %arg4[%c0_6, %c0_7] : memref<128x128xf32, #tpu.memory_space<vmem>>, vector<128x128xf32>
    %c0_8 = arith.constant 0 : index
    %c0_9 = arith.constant 0 : index
    %9 = vector.load %arg5[%c0_8, %c0_9] : memref<1x128xf32, #tpu.memory_space<vmem>>, vector<1x128xf32>
    %cst_10 = arith.constant dense<0.000000e+00> : vector<8x128xf32>
    %10 = tpu.matmul %7, %8, %cst_10 {dimension_numbers = #tpu.dot_dimension_numbers<[1], [0], [0], [1], [0, 0, 1, 1], [], []>} : vector<8x128xf32>, vector<128x128xf32>, vector<8x128xf32> -> vector<8x128xf32>
    %11 = vector.broadcast %9 : vector<1x128xf32> to vector<8x128xf32>
    %12 = arith.addf %10, %11 : vector<8x128xf32>
    %cst_11 = arith.constant 0.000000e+00 : f32
    %13 = vector.broadcast %cst_11 : f32 to vector<8x128xf32>
    %14 = arith.maximumf %12, %13 : vector<8x128xf32>
    %c0_12 = arith.constant 0 : index
    %c0_13 = arith.constant 0 : index
    %15 = vector.load %arg6[%c0_12, %c0_13] : memref<128x128xf32, #tpu.memory_space<vmem>>, vector<128x128xf32>
    %c0_14 = arith.constant 0 : index
    %c0_15 = arith.constant 0 : index
    %16 = vector.load %arg7[%c0_14, %c0_15] : memref<1x128xf32, #tpu.memory_space<vmem>>, vector<1x128xf32>
    %cst_16 = arith.constant dense<0.000000e+00> : vector<8x128xf32>
    %17 = tpu.matmul %14, %15, %cst_16 {dimension_numbers = #tpu.dot_dimension_numbers<[1], [0], [0], [1], [0, 0, 1, 1], [], []>} : vector<8x128xf32>, vector<128x128xf32>, vector<8x128xf32> -> vector<8x128xf32>
    %18 = vector.broadcast %16 : vector<1x128xf32> to vector<8x128xf32>
    %19 = arith.addf %17, %18 : vector<8x128xf32>
    %cst_17 = arith.constant 0.000000e+00 : f32
    %20 = vector.broadcast %cst_17 : f32 to vector<8x128xf32>
    %21 = arith.maximumf %19, %20 : vector<8x128xf32>
    %c0_18 = arith.constant 0 : index
    %c0_19 = arith.constant 0 : index
    %22 = vector.load %arg8[%c0_18, %c0_19] : memref<128x128xf32, #tpu.memory_space<vmem>>, vector<128x128xf32>
    %c0_20 = arith.constant 0 : index
    %c0_21 = arith.constant 0 : index
    %23 = vector.load %arg9[%c0_20, %c0_21] : memref<1x128xf32, #tpu.memory_space<vmem>>, vector<1x128xf32>
    %cst_22 = arith.constant 0.000000e+00 : f32
    %24 = vector.broadcast %cst_22 : f32 to vector<8x128xf32>
    %25 = arith.maximumf %21, %24 : vector<8x128xf32>
    %cst_23 = arith.constant dense<0.000000e+00> : vector<8x128xf32>
    %26 = tpu.matmul %25, %22, %cst_23 {dimension_numbers = #tpu.dot_dimension_numbers<[1], [0], [0], [1], [0, 0, 1, 1], [], []>} : vector<8x128xf32>, vector<128x128xf32>, vector<8x128xf32> -> vector<8x128xf32>
    %27 = vector.broadcast %23 : vector<1x128xf32> to vector<8x128xf32>
    %28 = arith.addf %26, %27 : vector<8x128xf32>
    %c0_24 = arith.constant 0 : index
    %c0_25 = arith.constant 0 : index
    %29 = vector.load %arg10[%c0_24, %c0_25] : memref<128x128xf32, #tpu.memory_space<vmem>>, vector<128x128xf32>
    %c0_26 = arith.constant 0 : index
    %c0_27 = arith.constant 0 : index
    %30 = vector.load %arg11[%c0_26, %c0_27] : memref<1x128xf32, #tpu.memory_space<vmem>>, vector<1x128xf32>
    %cst_28 = arith.constant 0.000000e+00 : f32
    %31 = vector.broadcast %cst_28 : f32 to vector<8x128xf32>
    %32 = arith.maximumf %28, %31 : vector<8x128xf32>
    %cst_29 = arith.constant dense<0.000000e+00> : vector<8x128xf32>
    %33 = tpu.matmul %32, %29, %cst_29 {dimension_numbers = #tpu.dot_dimension_numbers<[1], [0], [0], [1], [0, 0, 1, 1], [], []>} : vector<8x128xf32>, vector<128x128xf32>, vector<8x128xf32> -> vector<8x128xf32>
    %34 = vector.broadcast %30 : vector<1x128xf32> to vector<8x128xf32>
    %35 = arith.addf %33, %34 : vector<8x128xf32>
    %c0_30 = arith.constant 0 : index
    %c0_31 = arith.constant 0 : index
    %36 = vector.load %arg12[%c0_30, %c0_31] : memref<128x128xf32, #tpu.memory_space<vmem>>, vector<128x128xf32>
    %c0_32 = arith.constant 0 : index
    %c0_33 = arith.constant 0 : index
    %37 = vector.load %arg13[%c0_32, %c0_33] : memref<1x128xf32, #tpu.memory_space<vmem>>, vector<1x128xf32>
    %cst_34 = arith.constant 0.000000e+00 : f32
    %38 = vector.broadcast %cst_34 : f32 to vector<8x128xf32>
    %39 = arith.maximumf %35, %38 : vector<8x128xf32>
    %cst_35 = arith.constant dense<0.000000e+00> : vector<8x128xf32>
    %40 = tpu.matmul %39, %36, %cst_35 {dimension_numbers = #tpu.dot_dimension_numbers<[1], [0], [0], [1], [0, 0, 1, 1], [], []>} : vector<8x128xf32>, vector<128x128xf32>, vector<8x128xf32> -> vector<8x128xf32>
    %41 = vector.broadcast %37 : vector<1x128xf32> to vector<8x128xf32>
    %42 = arith.addf %40, %41 : vector<8x128xf32>
    %c0_36 = arith.constant 0 : index
    %c0_37 = arith.constant 0 : index
    %43 = vector.load %arg14[%c0_36, %c0_37] : memref<8x128xf32, #tpu.memory_space<vmem>>, vector<8x128xf32>
    tpu.vector_store %arg14[%c0_36, %c0_37], %42 {strides = array<i32>} : memref<8x128xf32, #tpu.memory_space<vmem>>, vector<8x128xf32>,
    return
  }
  func.func @transform_0(%arg0: i32) -> (i32, i32) {
    %c0_i32 = arith.constant 0 : i32
    %c0_i32_0 = arith.constant 0 : i32
    return %arg0, %c0_i32 : i32, i32
  }
  func.func @transform_1(%arg0: i32) -> (i32, i32) {
    %c0_i32 = arith.constant 0 : i32
    %c0_i32_0 = arith.constant 0 : i32
    %c0_i32_1 = arith.constant 0 : i32
    return %c0_i32, %c0_i32_0 : i32, i32
  }
  func.func @transform_2(%arg0: i32) -> (i32, i32) {
    %c0_i32 = arith.constant 0 : i32
    %c0_i32_0 = arith.constant 0 : i32
    %c0_i32_1 = arith.constant 0 : i32
    return %c0_i32, %c0_i32_0 : i32, i32
  }
  func.func @transform_3(%arg0: i32) -> (i32, i32) {
    %c0_i32 = arith.constant 0 : i32
    %c0_i32_0 = arith.constant 0 : i32
    %c0_i32_1 = arith.constant 0 : i32
    return %c0_i32, %c0_i32_0 : i32, i32
  }
  func.func @transform_4(%arg0: i32) -> (i32, i32) {
    %c0_i32 = arith.constant 0 : i32
    %c0_i32_0 = arith.constant 0 : i32
    %c0_i32_1 = arith.constant 0 : i32
    return %c0_i32, %c0_i32_0 : i32, i32
  }
  func.func @transform_5(%arg0: i32) -> (i32, i32) {
    %c0_i32 = arith.constant 0 : i32
    %c0_i32_0 = arith.constant 0 : i32
    %c0_i32_1 = arith.constant 0 : i32
    return %c0_i32, %c0_i32_0 : i32, i32
  }
  func.func @transform_6(%arg0: i32) -> (i32, i32) {
    %c0_i32 = arith.constant 0 : i32
    %c0_i32_0 = arith.constant 0 : i32
    %c0_i32_1 = arith.constant 0 : i32
    return %c0_i32, %c0_i32_0 : i32, i32
  }
  func.func @transform_7(%arg0: i32) -> (i32, i32) {
    %c0_i32 = arith.constant 0 : i32
    %c0_i32_0 = arith.constant 0 : i32
    %c0_i32_1 = arith.constant 0 : i32
    return %c0_i32, %c0_i32_0 : i32, i32
  }
  func.func @transform_8(%arg0: i32) -> (i32, i32) {
    %c0_i32 = arith.constant 0 : i32
    %c0_i32_0 = arith.constant 0 : i32
    %c0_i32_1 = arith.constant 0 : i32
    return %c0_i32, %c0_i32_0 : i32, i32
  }
  func.func @transform_9(%arg0: i32) -> (i32, i32) {
    %c0_i32 = arith.constant 0 : i32
    %c0_i32_0 = arith.constant 0 : i32
    %c0_i32_1 = arith.constant 0 : i32
    return %c0_i32, %c0_i32_0 : i32, i32
  }
  func.func @transform_10(%arg0: i32) -> (i32, i32) {
    %c0_i32 = arith.constant 0 : i32
    %c0_i32_0 = arith.constant 0 : i32
    %c0_i32_1 = arith.constant 0 : i32
    return %c0_i32, %c0_i32_0 : i32, i32
  }
  func.func @transform_11(%arg0: i32) -> (i32, i32) {
    %c0_i32 = arith.constant 0 : i32
    %c0_i32_0 = arith.constant 0 : i32
    %c0_i32_1 = arith.constant 0 : i32
    return %c0_i32, %c0_i32_0 : i32, i32
  }
  func.func @transform_12(%arg0: i32) -> (i32, i32) {
    %c0_i32 = arith.constant 0 : i32
    %c0_i32_0 = arith.constant 0 : i32
    %c0_i32_1 = arith.constant 0 : i32
    return %c0_i32, %c0_i32_0 : i32, i32
  }
  func.func @transform_13(%arg0: i32) -> (i32, i32) {
    %c0_i32 = arith.constant 0 : i32
    %c0_i32_0 = arith.constant 0 : i32
    return %arg0, %c0_i32 : i32, i32
  }
}

</mosaic_0001>

<llo_original>
// kernel: tpu_custom_call.1
$region0: #{tpu_custom_call.1}
  #allocation0 [shape = 'u32[]', space=smem, size = 0x4, offset = 0x4, fixed_abs, tag = 'smem constant byte address 0x4 - core index']
  #allocation1 [shape = 'u32[144,128]{1,0:T(1,128)}', space=vmem, size = 0x12000, scoped, tag = 'internal scratch']
  %s0 = inlined_call_operand.hbm [shape: f32[8,128], index: 0, kind: input, shape index: {}]
  %s1 = inlined_call_operand.hbm [shape: f32[128,128], index: 1, kind: input, shape index: {}]
  %s2 = inlined_call_operand.vmem [shape: f32[1,128], index: 2, kind: input, shape index: {}]
  %s3 = inlined_call_operand.hbm [shape: f32[128,128], index: 3, kind: input, shape index: {}]
  %s4 = inlined_call_operand.vmem [shape: f32[1,128], index: 4, kind: input, shape index: {}]
  %s5 = inlined_call_operand.hbm [shape: f32[128,128], index: 5, kind: input, shape index: {}]
  %s6 = inlined_call_operand.vmem [shape: f32[1,128], index: 6, kind: input, shape index: {}]
  %s7 = inlined_call_operand.hbm [shape: f32[128,128], index: 7, kind: input, shape index: {}]
  %s8 = inlined_call_operand.vmem [shape: f32[1,128], index: 8, kind: input, shape index: {}]
  %s9 = inlined_call_operand.hbm [shape: f32[128,128], index: 9, kind: input, shape index: {}]
  %s10 = inlined_call_operand.vmem [shape: f32[1,128], index: 10, kind: input, shape index: {}]
  %s11 = inlined_call_operand.hbm [shape: f32[128,128], index: 11, kind: input, shape index: {}]
  %s12 = inlined_call_operand.vmem [shape: f32[1,128], index: 12, kind: input, shape index: {}]
  %s13 = inlined_call_operand.hbm [shape: f32[8,128], index: 13, kind: output, shape index: {}]
  %s14 = sld [smem:[#allocation0]]
  $region90: #{tpu_custom_call.1} parent=0
    _
  %s16 = ssub.s32 1, %s14
  %s17 = scalar_select 0, %s16, %s14
  $region1: #{tpu_custom_call.1} parent=0
    #allocation2 [shape = 'u8[4096]{0}', space=vmem, size = 0x1000, scoped, tag = 'input window, operand 0, single buffered']
    #allocation3 [shape = 's32[1]{0}', space=sflag, size = 0x4, scoped, tag = 'scoped memory for tpu_custom_call.1']
    #allocation4 [shape = 's32[1]{0}', space=sflag, size = 0x4, scoped, tag = 'scoped memory for tpu_custom_call.1']
    #allocation5 [shape = 'u8[65536]{0}', space=vmem, size = 0x10000, scoped, tag = 'input window, operand 1, single buffered']
    #allocation6 [shape = 's32[1]{0}', space=sflag, size = 0x4, scoped, tag = 'scoped memory for tpu_custom_call.1']
    #allocation7 [shape = 'u8[65536]{0}', space=vmem, size = 0x10000, scoped, tag = 'input window, operand 3, single buffered']
    #allocation8 [shape = 'u8[65536]{0}', space=vmem, size = 0x10000, scoped, tag = 'input window, operand 5, single buffered']
    #allocation9 [shape = 's32[1]{0}', space=sflag, size = 0x4, scoped, tag = 'scoped memory for tpu_custom_call.1']
    #allocation10 [shape = 'u8[65536]{0}', space=vmem, size = 0x10000, scoped, tag = 'input window, operand 7, single buffered']
    #allocation11 [shape = 'u8[65536]{0}', space=vmem, size = 0x10000, scoped, tag = 'input window, operand 9, single buffered']
    #allocation12 [shape = 's32[1]{0}', space=sflag, size = 0x4, scoped, tag = 'scoped memory for tpu_custom_call.1']
    #allocation13 [shape = 'u8[65536]{0}', space=vmem, size = 0x10000, scoped, tag = 'input window, operand 11, single buffered']
    #allocation14 [shape = 'u8[4096]{0}', space=vmem, size = 0x1000, scoped, tag = 'output window, operand 0, single buffered']
    %18 = vsyncpa [#allocation3], 0
    %19 = vsyncpa [#allocation6], 0
    %20 = vsyncpa [#allocation9], 0
    %21 = vsyncpa [#allocation12], 0
    %22 = vsyncpa [#allocation4], 0
    // Predicated region
    $region2: #{tpu_custom_call.1} parent=1 // pred_check
      _
    $region3: #{tpu_custom_call.1} parent=1 // pred_check_branch
      %24 = sbr.rel (0) target = $region5
    $region4: #{tpu_custom_call.1} parent=1 // pred_region
      %s26 = ssub.s32 128, 128
      %27 = vsyncadd [#allocation3], %s26
      %s29 = sshll.u32 [#allocation2], 4
      %s30 = int_to_ptr.vmem [resolvable:$true] %s29
      %32 = dma.hbm_to_vmem [thread:$0]  %s0, 128, %s30, [#allocation3]
    $region5: #{tpu_custom_call.1} parent=1 // pred_fallthru
      _
    // Predicated region
    $region6: #{tpu_custom_call.1} parent=1 // pred_check
      _
    $region7: #{tpu_custom_call.1} parent=1 // pred_check_branch
      %34 = sbr.rel (0) target = $region9
    $region8: #{tpu_custom_call.1} parent=1 // pred_region
      %s36 = ssub.s32 2048, 2048
      %37 = vsyncadd [#allocation6], %s36
      %s38 = sshll.u32 [#allocation5], 4
      %s39 = int_to_ptr.vmem [resolvable:$true] %s38
      %44 = dma.hbm_to_vmem [thread:$0]  %s1, 2048, %s39, [#allocation6], 128, 128, 8
    $region9: #{tpu_custom_call.1} parent=1 // pred_fallthru
      _
    // Predicated region
    $region10: #{tpu_custom_call.1} parent=1 // pred_check
      _
    $region11: #{tpu_custom_call.1} parent=1 // pred_check_branch
      %46 = sbr.rel (0) target = $region13
    $region12: #{tpu_custom_call.1} parent=1 // pred_region
      _
    $region13: #{tpu_custom_call.1} parent=1 // pred_fallthru
      _
    // Predicated region
    $region14: #{tpu_custom_call.1} parent=1 // pred_check
      _
    $region15: #{tpu_custom_call.1} parent=1 // pred_check_branch
      %48 = sbr.rel (0) target = $region17
    $region16: #{tpu_custom_call.1} parent=1 // pred_region
      %s50 = ssub.s32 2048, 2048
      %51 = vsyncadd [#allocation6], %s50
      %s52 = sshll.u32 [#allocation7], 4
      %s53 = int_to_ptr.vmem [resolvable:$true] %s52
      %58 = dma.hbm_to_vmem [thread:$0]  %s3, 2048, %s53, [#allocation6], 128, 128, 8
    $region17: #{tpu_custom_call.1} parent=1 // pred_fallthru
      _
    // Predicated region
    $region18: #{tpu_custom_call.1} parent=1 // pred_check
      _
    $region19: #{tpu_custom_call.1} parent=1 // pred_check_branch
      %60 = sbr.rel (0) target = $region21
    $region20: #{tpu_custom_call.1} parent=1 // pred_region
      _
    $region21: #{tpu_custom_call.1} parent=1 // pred_fallthru
      _
    // Predicated region
    $region22: #{tpu_custom_call.1} parent=1 // pred_check
      _
    $region23: #{tpu_custom_call.1} parent=1 // pred_check_branch
      %62 = sbr.rel (0) target = $region25
    $region24: #{tpu_custom_call.1} parent=1 // pred_region
      %s64 = ssub.s32 2048, 2048
      %65 = vsyncadd [#allocation9], %s64
      %s66 = sshll.u32 [#allocation8], 4
      %s67 = int_to_ptr.vmem [resolvable:$true] %s66
      %72 = dma.hbm_to_vmem [thread:$0]  %s5, 2048, %s67, [#allocation9], 128, 128, 8
    $region25: #{tpu_custom_call.1} parent=1 // pred_fallthru
      _
    // Predicated region
    $region26: #{tpu_custom_call.1} parent=1 // pred_check
      _
    $region27: #{tpu_custom_call.1} parent=1 // pred_check_branch
      %74 = sbr.rel (0) target = $region29
    $region28: #{tpu_custom_call.1} parent=1 // pred_region
      _
    $region29: #{tpu_custom_call.1} parent=1 // pred_fallthru
      _
    // Predicated region
    $region30: #{tpu_custom_call.1} parent=1 // pred_check
      _
    $region31: #{tpu_custom_call.1} parent=1 // pred_check_branch
      %76 = sbr.rel (0) target = $region33
    $region32: #{tpu_custom_call.1} parent=1 // pred_region
      %s78 = ssub.s32 2048, 2048
      %79 = vsyncadd [#allocation9], %s78
      %s80 = sshll.u32 [#allocation10], 4
      %s81 = int_to_ptr.vmem [resolvable:$true] %s80
      %86 = dma.hbm_to_vmem [thread:$0]  %s7, 2048, %s81, [#allocation9], 128, 128, 8
    $region33: #{tpu_custom_call.1} parent=1 // pred_fallthru
      _
    // Predicated region
    $region34: #{tpu_custom_call.1} parent=1 // pred_check
      _
    $region35: #{tpu_custom_call.1} parent=1 // pred_check_branch
      %88 = sbr.rel (0) target = $region37
    $region36: #{tpu_custom_call.1} parent=1 // pred_region
      _
    $region37: #{tpu_custom_call.1} parent=1 // pred_fallthru
      _
    // Predicated region
    $region38: #{tpu_custom_call.1} parent=1 // pred_check
      _
    $region39: #{tpu_custom_call.1} parent=1 // pred_check_branch
      %90 = sbr.rel (0) target = $region41
    $region40: #{tpu_custom_call.1} parent=1 // pred_region
      %s92 = ssub.s32 2048, 2048
      %93 = vsyncadd [#allocation12], %s92
      %s94 = sshll.u32 [#allocation11], 4
      %s95 = int_to_ptr.vmem [resolvable:$true] %s94
      %100 = dma.hbm_to_vmem [thread:$0]  %s9, 2048, %s95, [#allocation12], 128, 128, 8
    $region41: #{tpu_custom_call.1} parent=1 // pred_fallthru
      _
    // Predicated region
    $region42: #{tpu_custom_call.1} parent=1 // pred_check
      _
    $region43: #{tpu_custom_call.1} parent=1 // pred_check_branch
      %102 = sbr.rel (0) target = $region45
    $region44: #{tpu_custom_call.1} parent=1 // pred_region
      _
    $region45: #{tpu_custom_call.1} parent=1 // pred_fallthru
      _
    // Predicated region
    $region46: #{tpu_custom_call.1} parent=1 // pred_check
      _
    $region47: #{tpu_custom_call.1} parent=1 // pred_check_branch
      %104 = sbr.rel (0) target = $region49
    $region48: #{tpu_custom_call.1} parent=1 // pred_region
      %s106 = ssub.s32 2048, 2048
      %107 = vsyncadd [#allocation12], %s106
      %s108 = sshll.u32 [#allocation13], 4
      %s109 = int_to_ptr.vmem [resolvable:$true] %s108
      %114 = dma.hbm_to_vmem [thread:$0]  %s11, 2048, %s109, [#allocation12], 128, 128, 8
    $region49: #{tpu_custom_call.1} parent=1 // pred_fallthru
      _
    // Predicated region
    $region50: #{tpu_custom_call.1} parent=1 // pred_check
      _
    $region51: #{tpu_custom_call.1} parent=1 // pred_check_branch
      %116 = sbr.rel (0) target = $region53
    $region52: #{tpu_custom_call.1} parent=1 // pred_region
      _
    $region53: #{tpu_custom_call.1} parent=1 // pred_fallthru
      _
    // Predicated region
    $region54: #{tpu_custom_call.1} parent=1 // pred_check
      _
    $region55: #{tpu_custom_call.1} parent=1 // pred_check_branch
      %118 = sbr.rel (0) target = $region57
    $region56: #{tpu_custom_call.1} parent=1 // pred_region
      %119 = dma.done [#allocation3], 128
    $region57: #{tpu_custom_call.1} parent=1 // pred_fallthru
      _
    // Predicated region
    $region58: #{tpu_custom_call.1} parent=1 // pred_check
      _
    $region59: #{tpu_custom_call.1} parent=1 // pred_check_branch
      %121 = sbr.rel (0) target = $region61
    $region60: #{tpu_custom_call.1} parent=1 // pred_region
      %122 = dma.done [#allocation6], 2048
    $region61: #{tpu_custom_call.1} parent=1 // pred_fallthru
      _
    // Predicated region
    $region62: #{tpu_custom_call.1} parent=1 // pred_check
      _
    $region63: #{tpu_custom_call.1} parent=1 // pred_check_branch
      %124 = sbr.rel (0) target = $region65
    $region64: #{tpu_custom_call.1} parent=1 // pred_region
      %125 = dma.done [#allocation6], 2048
    $region65: #{tpu_custom_call.1} parent=1 // pred_fallthru
      _
    // Predicated region
    $region66: #{tpu_custom_call.1} parent=1 // pred_check
      _
    $region67: #{tpu_custom_call.1} parent=1 // pred_check_branch
      %127 = sbr.rel (0) target = $region69
    $region68: #{tpu_custom_call.1} parent=1 // pred_region
      %128 = dma.done [#allocation9], 2048
    $region69: #{tpu_custom_call.1} parent=1 // pred_fallthru
      _
    // Predicated region
    $region70: #{tpu_custom_call.1} parent=1 // pred_check
      _
    $region71: #{tpu_custom_call.1} parent=1 // pred_check_branch
      %130 = sbr.rel (0) target = $region73
    $region72: #{tpu_custom_call.1} parent=1 // pred_region
      %131 = dma.done [#allocation9], 2048
    $region73: #{tpu_custom_call.1} parent=1 // pred_fallthru
      _
    // Predicated region
    $region74: #{tpu_custom_call.1} parent=1 // pred_check
      _
    $region75: #{tpu_custom_call.1} parent=1 // pred_check_branch
      %133 = sbr.rel (0) target = $region77
    $region76: #{tpu_custom_call.1} parent=1 // pred_region
      %134 = dma.done [#allocation12], 2048
    $region77: #{tpu_custom_call.1} parent=1 // pred_fallthru
      _
    // Predicated region
    $region78: #{tpu_custom_call.1} parent=1 // pred_check
      _
    $region79: #{tpu_custom_call.1} parent=1 // pred_check_branch
      %136 = sbr.rel (0) target = $region81
    $region80: #{tpu_custom_call.1} parent=1 // pred_region
      %137 = dma.done [#allocation12], 2048
    $region81: #{tpu_custom_call.1} parent=1 // pred_fallthru
      _
    %v138 = vld [vmem:[#allocation2] sm:$0xff]
    %v139 = vld [vmem:[#allocation5] sm:$0xff]
    %v140 = vld [vmem:[#allocation5 + $0x8] sm:$0xff]
    %v141 = vld [vmem:[#allocation5 + $0x10] sm:$0xff]
    %v142 = vld [vmem:[#allocation5 + $0x18] sm:$0xff]
    %v143 = vld [vmem:[#allocation5 + $0x20] sm:$0xff]
    %v144 = vld [vmem:[#allocation5 + $0x28] sm:$0xff]
    %v145 = vld [vmem:[#allocation5 + $0x30] sm:$0xff]
    %v146 = vld [vmem:[#allocation5 + $0x38] sm:$0xff]
    %v147 = vld [vmem:[#allocation5 + $0x40] sm:$0xff]
    %v148 = vld [vmem:[#allocation5 + $0x48] sm:$0xff]
    %v149 = vld [vmem:[#allocation5 + $0x50] sm:$0xff]
    %v150 = vld [vmem:[#allocation5 + $0x58] sm:$0xff]
    %v151 = vld [vmem:[#allocation5 + $0x60] sm:$0xff]
    %v152 = vld [vmem:[#allocation5 + $0x68] sm:$0xff]
    %v153 = vld [vmem:[#allocation5 + $0x70] sm:$0xff]
    %v154 = vld [vmem:[#allocation5 + $0x78] sm:$0xff]
    %v155 = vld [vmem:[%s2] sm:$0x1]
    %v157 = vlaneseq
    %v158 = vshrl.u32 %v157, 7
    %v159 = vsub.s32 0, %v158
    %v160 = vrot.slane %v155, %v159
    %162 = vmatprep.subr.mxu0 0.0
    %163 = vmatpush1.msra.mxu0 %v139
    %164 = vmatprep.subr.mxu0 0.0
    %165 = vmatpush1.msra.mxu0 %v140
    %166 = vmatprep.subr.mxu0 0.0
    %167 = vmatpush1.msra.mxu0 %v141
    %168 = vmatprep.subr.mxu0 0.0
    %169 = vmatpush1.msra.mxu0 %v142
    %170 = vmatprep.subr.mxu0 0.0
    %171 = vmatpush1.msra.mxu0 %v143
    %172 = vmatprep.subr.mxu0 0.0
    %173 = vmatpush1.msra.mxu0 %v144
    %174 = vmatprep.subr.mxu0 0.0
    %175 = vmatpush1.msra.mxu0 %v145
    %176 = vmatprep.subr.mxu0 0.0
    %177 = vmatpush1.msra.mxu0 %v146
    %178 = vmatprep.subr.mxu0 0.0
    %179 = vmatpush1.msra.mxu0 %v147
    %180 = vmatprep.subr.mxu0 0.0
    %181 = vmatpush1.msra.mxu0 %v148
    %182 = vmatprep.subr.mxu0 0.0
    %183 = vmatpush1.msra.mxu0 %v149
    %184 = vmatprep.subr.mxu0 0.0
    %185 = vmatpush1.msra.mxu0 %v150
    %186 = vmatprep.subr.mxu0 0.0
    %187 = vmatpush1.msra.mxu0 %v151
    %188 = vmatprep.subr.mxu0 0.0
    %189 = vmatpush1.msra.mxu0 %v152
    %190 = vmatprep.subr.mxu0 0.0
    %191 = vmatpush1.msra.mxu0 %v153
    %192 = vmatprep.subr.mxu0 0.0
    %193 = vmatpush1.msra.mxu0 %v154
    %194 = vmatprep.subr.mxu0 0.0
    %195 = vmatpush1.msra.mxu0 0.0
    %196 = vmatprep.subr.mxu0 0.0
    %197 = vmatpush1.msra.mxu0 0.0
    %198 = vmatprep.subr.mxu0 0.0
    %199 = vmatpush1.msra.mxu0 0.0
    %200 = vmatprep.subr.mxu0 0.0
    %201 = vmatpush1.msra.mxu0 0.0
    %202 = vmatprep.subr.mxu0 0.0
    %203 = vmatpush1.msra.mxu0 0.0
    %204 = vmatprep.subr.mxu0 0.0
    %205 = vmatpush1.msra.mxu0 0.0
    %206 = vmatprep.subr.mxu0 0.0
    %207 = vmatpush1.msra.mxu0 0.0
    %208 = vmatprep.subr.mxu0 0.0
    %209 = vmatpush1.msra.mxu0 0.0
    %210 = vmatprep.subr.mxu0 0.0
    %211 = vmatpush1.msra.mxu0 0.0
    %212 = vmatprep.subr.mxu0 0.0
    %213 = vmatpush1.msra.mxu0 0.0
    %214 = vmatprep.subr.mxu0 0.0
    %215 = vmatpush1.msra.mxu0 0.0
    %216 = vmatprep.subr.mxu0 0.0
    %217 = vmatpush1.msra.mxu0 0.0
    %218 = vmatprep.subr.mxu0 0.0
    %219 = vmatpush1.msra.mxu0 0.0
    %220 = vmatprep.subr.mxu0 0.0
    %221 = vmatpush1.msra.mxu0 0.0
    %222 = vmatprep.subr.mxu0 0.0
    %223 = vmatpush1.msra.mxu0 0.0
    %224 = vmatprep.subr.mxu0 0.0
    %225 = vmatpush1.msra.mxu0 0.0
    %226 = vmatprep.mubr.f32.mxu0 0.0
    %227 = vmatmul.mubr.f32.gmra.mrb[0].mxu0 %v138
    %v228 = vpop.f32.mrb[0].mxu0
    %v229 = vadd.f32 %v160, %v228
    %v230 = vpop.f32.mrb[0].mxu0
    %231 = vdwg.mxu0
    %v232 = vmax.f32 %v229, 0.0
    %v233 = vld [vmem:[#allocation7] sm:$0xff]
    %v234 = vld [vmem:[#allocation7 + $0x8] sm:$0xff]
    %v235 = vld [vmem:[#allocation7 + $0x10] sm:$0xff]
    %v236 = vld [vmem:[#allocation7 + $0x18] sm:$0xff]
    %v237 = vld [vmem:[#allocation7 + $0x20] sm:$0xff]
    %v238 = vld [vmem:[#allocation7 + $0x28] sm:$0xff]
    %v239 = vld [vmem:[#allocation7 + $0x30] sm:$0xff]
    %v240 = vld [vmem:[#allocation7 + $0x38] sm:$0xff]
    %v241 = vld [vmem:[#allocation7 + $0x40] sm:$0xff]
    %v242 = vld [vmem:[#allocation7 + $0x48] sm:$0xff]
    %v243 = vld [vmem:[#allocation7 + $0x50] sm:$0xff]
    %v244 = vld [vmem:[#allocation7 + $0x58] sm:$0xff]
    %v245 = vld [vmem:[#allocation7 + $0x60] sm:$0xff]
    %v246 = vld [vmem:[#allocation7 + $0x68] sm:$0xff]
    %v247 = vld [vmem:[#allocation7 + $0x70] sm:$0xff]
    %v248 = vld [vmem:[#allocation7 + $0x78] sm:$0xff]
    %v249 = vld [vmem:[%s4] sm:$0x1]
    %v251 = vlaneseq
    %v252 = vshrl.u32 %v251, 7
    %v253 = vsub.s32 0, %v252
    %v254 = vrot.slane %v249, %v253
    %256 = vmatprep.subr.mxu0 0.0
    %257 = vmatpush1.msra.mxu0 %v233
    %258 = vmatprep.subr.mxu0 0.0
    %259 = vmatpush1.msra.mxu0 %v234
    %260 = vmatprep.subr.mxu0 0.0
    %261 = vmatpush1.msra.mxu0 %v235
    %262 = vmatprep.subr.mxu0 0.0
    %263 = vmatpush1.msra.mxu0 %v236
    %264 = vmatprep.subr.mxu0 0.0
    %265 = vmatpush1.msra.mxu0 %v237
    %266 = vmatprep.subr.mxu0 0.0
    %267 = vmatpush1.msra.mxu0 %v238
    %268 = vmatprep.subr.mxu0 0.0
    %269 = vmatpush1.msra.mxu0 %v239
    %270 = vmatprep.subr.mxu0 0.0
    %271 = vmatpush1.msra.mxu0 %v240
    %272 = vmatprep.subr.mxu0 0.0
    %273 = vmatpush1.msra.mxu0 %v241
    %274 = vmatprep.subr.mxu0 0.0
    %275 = vmatpush1.msra.mxu0 %v242
    %276 = vmatprep.subr.mxu0 0.0
    %277 = vmatpush1.msra.mxu0 %v243
    %278 = vmatprep.subr.mxu0 0.0
    %279 = vmatpush1.msra.mxu0 %v244
    %280 = vmatprep.subr.mxu0 0.0
    %281 = vmatpush1.msra.mxu0 %v245
    %282 = vmatprep.subr.mxu0 0.0
    %283 = vmatpush1.msra.mxu0 %v246
    %284 = vmatprep.subr.mxu0 0.0
    %285 = vmatpush1.msra.mxu0 %v247
    %286 = vmatprep.subr.mxu0 0.0
    %287 = vmatpush1.msra.mxu0 %v248
    %288 = vmatprep.subr.mxu0 0.0
    %289 = vmatpush1.msra.mxu0 0.0
    %290 = vmatprep.subr.mxu0 0.0
    %291 = vmatpush1.msra.mxu0 0.0
    %292 = vmatprep.subr.mxu0 0.0
    %293 = vmatpush1.msra.mxu0 0.0
    %294 = vmatprep.subr.mxu0 0.0
    %295 = vmatpush1.msra.mxu0 0.0
    %296 = vmatprep.subr.mxu0 0.0
    %297 = vmatpush1.msra.mxu0 0.0
    %298 = vmatprep.subr.mxu0 0.0
    %299 = vmatpush1.msra.mxu0 0.0
    %300 = vmatprep.subr.mxu0 0.0
    %301 = vmatpush1.msra.mxu0 0.0
    %302 = vmatprep.subr.mxu0 0.0
    %303 = vmatpush1.msra.mxu0 0.0
    %304 = vmatprep.subr.mxu0 0.0
    %305 = vmatpush1.msra.mxu0 0.0
    %306 = vmatprep.subr.mxu0 0.0
    %307 = vmatpush1.msra.mxu0 0.0
    %308 = vmatprep.subr.mxu0 0.0
    %309 = vmatpush1.msra.mxu0 0.0
    %310 = vmatprep.subr.mxu0 0.0
    %311 = vmatpush1.msra.mxu0 0.0
    %312 = vmatprep.subr.mxu0 0.0
    %313 = vmatpush1.msra.mxu0 0.0
    %314 = vmatprep.subr.mxu0 0.0
    %315 = vmatpush1.msra.mxu0 0.0
    %316 = vmatprep.subr.mxu0 0.0
    %317 = vmatpush1.msra.mxu0 0.0
    %318 = vmatprep.subr.mxu0 0.0
    %319 = vmatpush1.msra.mxu0 0.0
    %320 = vmatprep.mubr.f32.mxu0 0.0
    %321 = vmatmul.mubr.f32.gmra.mrb[0].mxu0 %v232
    %v322 = vpop.f32.mrb[0].mxu0
    %v323 = vadd.f32 %v254, %v322
    %v324 = vpop.f32.mrb[0].mxu0
    %325 = vdwg.mxu0
    %v326 = vmax.f32 %v323, 0.0
    %v327 = vld [vmem:[#allocation8] sm:$0xff]
    %v328 = vld [vmem:[#allocation8 + $0x8] sm:$0xff]
    %v329 = vld [vmem:[#allocation8 + $0x10] sm:$0xff]
    %v330 = vld [vmem:[#allocation8 + $0x18] sm:$0xff]
    %v331 = vld [vmem:[#allocation8 + $0x20] sm:$0xff]
    %v332 = vld [vmem:[#allocation8 + $0x28] sm:$0xff]
    %v333 = vld [vmem:[#allocation8 + $0x30] sm:$0xff]
    %v334 = vld [vmem:[#allocation8 + $0x38] sm:$0xff]
    %v335 = vld [vmem:[#allocation8 + $0x40] sm:$0xff]
    %v336 = vld [vmem:[#allocation8 + $0x48] sm:$0xff]
    %v337 = vld [vmem:[#allocation8 + $0x50] sm:$0xff]
    %v338 = vld [vmem:[#allocation8 + $0x58] sm:$0xff]
    %v339 = vld [vmem:[#allocation8 + $0x60] sm:$0xff]
    %v340 = vld [vmem:[#allocation8 + $0x68] sm:$0xff]
    %v341 = vld [vmem:[#allocation8 + $0x70] sm:$0xff]
    %v342 = vld [vmem:[#allocation8 + $0x78] sm:$0xff]
    %v343 = vld [vmem:[%s6] sm:$0x1]
    %v345 = vlaneseq
    %v346 = vshrl.u32 %v345, 7
    %v347 = vsub.s32 0, %v346
    %v348 = vrot.slane %v343, %v347
    %350 = vmatprep.subr.mxu0 0.0
    %351 = vmatpush1.msra.mxu0 %v327
    %352 = vmatprep.subr.mxu0 0.0
    %353 = vmatpush1.msra.mxu0 %v328
    %354 = vmatprep.subr.mxu0 0.0
    %355 = vmatpush1.msra.mxu0 %v329
    %356 = vmatprep.subr.mxu0 0.0
    %357 = vmatpush1.msra.mxu0 %v330
    %358 = vmatprep.subr.mxu0 0.0
    %359 = vmatpush1.msra.mxu0 %v331
    %360 = vmatprep.subr.mxu0 0.0
    %361 = vmatpush1.msra.mxu0 %v332
    %362 = vmatprep.subr.mxu0 0.0
    %363 = vmatpush1.msra.mxu0 %v333
    %364 = vmatprep.subr.mxu0 0.0
    %365 = vmatpush1.msra.mxu0 %v334
    %366 = vmatprep.subr.mxu0 0.0
    %367 = vmatpush1.msra.mxu0 %v335
    %368 = vmatprep.subr.mxu0 0.0
    %369 = vmatpush1.msra.mxu0 %v336
    %370 = vmatprep.subr.mxu0 0.0
    %371 = vmatpush1.msra.mxu0 %v337
    %372 = vmatprep.subr.mxu0 0.0
    %373 = vmatpush1.msra.mxu0 %v338
    %374 = vmatprep.subr.mxu0 0.0
    %375 = vmatpush1.msra.mxu0 %v339
    %376 = vmatprep.subr.mxu0 0.0
    %377 = vmatpush1.msra.mxu0 %v340
    %378 = vmatprep.subr.mxu0 0.0
    %379 = vmatpush1.msra.mxu0 %v341
    %380 = vmatprep.subr.mxu0 0.0
    %381 = vmatpush1.msra.mxu0 %v342
    %382 = vmatprep.subr.mxu0 0.0
    %383 = vmatpush1.msra.mxu0 0.0
    %384 = vmatprep.subr.mxu0 0.0
    %385 = vmatpush1.msra.mxu0 0.0
    %386 = vmatprep.subr.mxu0 0.0
    %387 = vmatpush1.msra.mxu0 0.0
    %388 = vmatprep.subr.mxu0 0.0
    %389 = vmatpush1.msra.mxu0 0.0
    %390 = vmatprep.subr.mxu0 0.0
    %391 = vmatpush1.msra.mxu0 0.0
    %392 = vmatprep.subr.mxu0 0.0
    %393 = vmatpush1.msra.mxu0 0.0
    %394 = vmatprep.subr.mxu0 0.0
    %395 = vmatpush1.msra.mxu0 0.0
    %396 = vmatprep.subr.mxu0 0.0
    %397 = vmatpush1.msra.mxu0 0.0
    %398 = vmatprep.subr.mxu0 0.0
    %399 = vmatpush1.msra.mxu0 0.0
    %400 = vmatprep.subr.mxu0 0.0
    %401 = vmatpush1.msra.mxu0 0.0
    %402 = vmatprep.subr.mxu0 0.0
    %403 = vmatpush1.msra.mxu0 0.0
    %404 = vmatprep.subr.mxu0 0.0
    %405 = vmatpush1.msra.mxu0 0.0
    %406 = vmatprep.subr.mxu0 0.0
    %407 = vmatpush1.msra.mxu0 0.0
    %408 = vmatprep.subr.mxu0 0.0
    %409 = vmatpush1.msra.mxu0 0.0
    %410 = vmatprep.subr.mxu0 0.0
    %411 = vmatpush1.msra.mxu0 0.0
    %412 = vmatprep.subr.mxu0 0.0
    %413 = vmatpush1.msra.mxu0 0.0
    %414 = vmatprep.mubr.f32.mxu0 0.0
    %415 = vmatmul.mubr.f32.gmra.mrb[0].mxu0 %v326
    %v416 = vpop.f32.mrb[0].mxu0
    %v417 = vadd.f32 %v348, %v416
    %v418 = vpop.f32.mrb[0].mxu0
    %419 = vdwg.mxu0
    %v420 = vmax.f32 %v417, 0.0
    %v421 = vld [vmem:[#allocation10] sm:$0xff]
    %v422 = vld [vmem:[#allocation10 + $0x8] sm:$0xff]
    %v423 = vld [vmem:[#allocation10 + $0x10] sm:$0xff]
    %v424 = vld [vmem:[#allocation10 + $0x18] sm:$0xff]
    %v425 = vld [vmem:[#allocation10 + $0x20] sm:$0xff]
    %v426 = vld [vmem:[#allocation10 + $0x28] sm:$0xff]
    %v427 = vld [vmem:[#allocation10 + $0x30] sm:$0xff]
    %v428 = vld [vmem:[#allocation10 + $0x38] sm:$0xff]
    %v429 = vld [vmem:[#allocation10 + $0x40] sm:$0xff]
    %v430 = vld [vmem:[#allocation10 + $0x48] sm:$0xff]
    %v431 = vld [vmem:[#allocation10 + $0x50] sm:$0xff]
    %v432 = vld [vmem:[#allocation10 + $0x58] sm:$0xff]
    %v433 = vld [vmem:[#allocation10 + $0x60] sm:$0xff]
    %v434 = vld [vmem:[#allocation10 + $0x68] sm:$0xff]
    %v435 = vld [vmem:[#allocation10 + $0x70] sm:$0xff]
    %v436 = vld [vmem:[#allocation10 + $0x78] sm:$0xff]
    %v437 = vld [vmem:[%s8] sm:$0x1]
    %v438 = vmax.f32 %v420, 0.0
    %v440 = vlaneseq
    %v441 = vshrl.u32 %v440, 7
    %v442 = vsub.s32 0, %v441
    %v443 = vrot.slane %v437, %v442
    %445 = vmatprep.subr.mxu0 0.0
    %446 = vmatpush1.msra.mxu0 %v421
    %447 = vmatprep.subr.mxu0 0.0
    %448 = vmatpush1.msra.mxu0 %v422
    %449 = vmatprep.subr.mxu0 0.0
    %450 = vmatpush1.msra.mxu0 %v423
    %451 = vmatprep.subr.mxu0 0.0
    %452 = vmatpush1.msra.mxu0 %v424
    %453 = vmatprep.subr.mxu0 0.0
    %454 = vmatpush1.msra.mxu0 %v425
    %455 = vmatprep.subr.mxu0 0.0
    %456 = vmatpush1.msra.mxu0 %v426
    %457 = vmatprep.subr.mxu0 0.0
    %458 = vmatpush1.msra.mxu0 %v427
    %459 = vmatprep.subr.mxu0 0.0
    %460 = vmatpush1.msra.mxu0 %v428
    %461 = vmatprep.subr.mxu0 0.0
    %462 = vmatpush1.msra.mxu0 %v429
    %463 = vmatprep.subr.mxu0 0.0
    %464 = vmatpush1.msra.mxu0 %v430
    %465 = vmatprep.subr.mxu0 0.0
    %466 = vmatpush1.msra.mxu0 %v431
    %467 = vmatprep.subr.mxu0 0.0
    %468 = vmatpush1.msra.mxu0 %v432
    %469 = vmatprep.subr.mxu0 0.0
    %470 = vmatpush1.msra.mxu0 %v433
    %471 = vmatprep.subr.mxu0 0.0
    %472 = vmatpush1.msra.mxu0 %v434
    %473 = vmatprep.subr.mxu0 0.0
    %474 = vmatpush1.msra.mxu0 %v435
    %475 = vmatprep.subr.mxu0 0.0
    %476 = vmatpush1.msra.mxu0 %v436
    %477 = vmatprep.subr.mxu0 0.0
    %478 = vmatpush1.msra.mxu0 0.0
    %479 = vmatprep.subr.mxu0 0.0
    %480 = vmatpush1.msra.mxu0 0.0
    %481 = vmatprep.subr.mxu0 0.0
    %482 = vmatpush1.msra.mxu0 0.0
    %483 = vmatprep.subr.mxu0 0.0
    %484 = vmatpush1.msra.mxu0 0.0
    %485 = vmatprep.subr.mxu0 0.0
    %486 = vmatpush1.msra.mxu0 0.0
    %487 = vmatprep.subr.mxu0 0.0
    %488 = vmatpush1.msra.mxu0 0.0
    %489 = vmatprep.subr.mxu0 0.0
    %490 = vmatpush1.msra.mxu0 0.0
    %491 = vmatprep.subr.mxu0 0.0
    %492 = vmatpush1.msra.mxu0 0.0
    %493 = vmatprep.subr.mxu0 0.0
    %494 = vmatpush1.msra.mxu0 0.0
    %495 = vmatprep.subr.mxu0 0.0
    %496 = vmatpush1.msra.mxu0 0.0
    %497 = vmatprep.subr.mxu0 0.0
    %498 = vmatpush1.msra.mxu0 0.0
    %499 = vmatprep.subr.mxu0 0.0
    %500 = vmatpush1.msra.mxu0 0.0
    %501 = vmatprep.subr.mxu0 0.0
    %502 = vmatpush1.msra.mxu0 0.0
    %503 = vmatprep.subr.mxu0 0.0
    %504 = vmatpush1.msra.mxu0 0.0
    %505 = vmatprep.subr.mxu0 0.0
    %506 = vmatpush1.msra.mxu0 0.0
    %507 = vmatprep.subr.mxu0 0.0
    %508 = vmatpush1.msra.mxu0 0.0
    %509 = vmatprep.mubr.f32.mxu0 0.0
    %510 = vmatmul.mubr.f32.gmra.mrb[0].mxu0 %v438
    %v511 = vpop.f32.mrb[0].mxu0
    %v512 = vadd.f32 %v443, %v511
    %v513 = vpop.f32.mrb[0].mxu0
    %514 = vdwg.mxu0
    %v515 = vld [vmem:[#allocation11] sm:$0xff]
    %v516 = vld [vmem:[#allocation11 + $0x8] sm:$0xff]
    %v517 = vld [vmem:[#allocation11 + $0x10] sm:$0xff]
    %v518 = vld [vmem:[#allocation11 + $0x18] sm:$0xff]
    %v519 = vld [vmem:[#allocation11 + $0x20] sm:$0xff]
    %v520 = vld [vmem:[#allocation11 + $0x28] sm:$0xff]
    %v521 = vld [vmem:[#allocation11 + $0x30] sm:$0xff]
    %v522 = vld [vmem:[#allocation11 + $0x38] sm:$0xff]
    %v523 = vld [vmem:[#allocation11 + $0x40] sm:$0xff]
    %v524 = vld [vmem:[#allocation11 + $0x48] sm:$0xff]
    %v525 = vld [vmem:[#allocation11 + $0x50] sm:$0xff]
    %v526 = vld [vmem:[#allocation11 + $0x58] sm:$0xff]
    %v527 = vld [vmem:[#allocation11 + $0x60] sm:$0xff]
    %v528 = vld [vmem:[#allocation11 + $0x68] sm:$0xff]
    %v529 = vld [vmem:[#allocation11 + $0x70] sm:$0xff]
    %v530 = vld [vmem:[#allocation11 + $0x78] sm:$0xff]
    %v531 = vld [vmem:[%s10] sm:$0x1]
    %v532 = vmax.f32 %v512, 0.0
    %v534 = vlaneseq
    %v535 = vshrl.u32 %v534, 7
    %v536 = vsub.s32 0, %v535
    %v537 = vrot.slane %v531, %v536
    %539 = vmatprep.subr.mxu0 0.0
    %540 = vmatpush1.msra.mxu0 %v515
    %541 = vmatprep.subr.mxu0 0.0
    %542 = vmatpush1.msra.mxu0 %v516
    %543 = vmatprep.subr.mxu0 0.0
    %544 = vmatpush1.msra.mxu0 %v517
    %545 = vmatprep.subr.mxu0 0.0
    %546 = vmatpush1.msra.mxu0 %v518
    %547 = vmatprep.subr.mxu0 0.0
    %548 = vmatpush1.msra.mxu0 %v519
    %549 = vmatprep.subr.mxu0 0.0
    %550 = vmatpush1.msra.mxu0 %v520
    %551 = vmatprep.subr.mxu0 0.0
    %552 = vmatpush1.msra.mxu0 %v521
    %553 = vmatprep.subr.mxu0 0.0
    %554 = vmatpush1.msra.mxu0 %v522
    %555 = vmatprep.subr.mxu0 0.0
    %556 = vmatpush1.msra.mxu0 %v523
    %557 = vmatprep.subr.mxu0 0.0
    %558 = vmatpush1.msra.mxu0 %v524
    %559 = vmatprep.subr.mxu0 0.0
    %560 = vmatpush1.msra.mxu0 %v525
    %561 = vmatprep.subr.mxu0 0.0
    %562 = vmatpush1.msra.mxu0 %v526
    %563 = vmatprep.subr.mxu0 0.0
    %564 = vmatpush1.msra.mxu0 %v527
    %565 = vmatprep.subr.mxu0 0.0
    %566 = vmatpush1.msra.mxu0 %v528
    %567 = vmatprep.subr.mxu0 0.0
    %568 = vmatpush1.msra.mxu0 %v529
    %569 = vmatprep.subr.mxu0 0.0
    %570 = vmatpush1.msra.mxu0 %v530
    %571 = vmatprep.subr.mxu0 0.0
    %572 = vmatpush1.msra.mxu0 0.0
    %573 = vmatprep.subr.mxu0 0.0
    %574 = vmatpush1.msra.mxu0 0.0
    %575 = vmatprep.subr.mxu0 0.0
    %576 = vmatpush1.msra.mxu0 0.0
    %577 = vmatprep.subr.mxu0 0.0
    %578 = vmatpush1.msra.mxu0 0.0
    %579 = vmatprep.subr.mxu0 0.0
    %580 = vmatpush1.msra.mxu0 0.0
    %581 = vmatprep.subr.mxu0 0.0
    %582 = vmatpush1.msra.mxu0 0.0
    %583 = vmatprep.subr.mxu0 0.0
    %584 = vmatpush1.msra.mxu0 0.0
    %585 = vmatprep.subr.mxu0 0.0
    %586 = vmatpush1.msra.mxu0 0.0
    %587 = vmatprep.subr.mxu0 0.0
    %588 = vmatpush1.msra.mxu0 0.0
    %589 = vmatprep.subr.mxu0 0.0
    %590 = vmatpush1.msra.mxu0 0.0
    %591 = vmatprep.subr.mxu0 0.0
    %592 = vmatpush1.msra.mxu0 0.0
    %593 = vmatprep.subr.mxu0 0.0
    %594 = vmatpush1.msra.mxu0 0.0
    %595 = vmatprep.subr.mxu0 0.0
    %596 = vmatpush1.msra.mxu0 0.0
    %597 = vmatprep.subr.mxu0 0.0
    %598 = vmatpush1.msra.mxu0 0.0
    %599 = vmatprep.subr.mxu0 0.0
    %600 = vmatpush1.msra.mxu0 0.0
    %601 = vmatprep.subr.mxu0 0.0
    %602 = vmatpush1.msra.mxu0 0.0
    %603 = vmatprep.mubr.f32.mxu0 0.0
    %604 = vmatmul.mubr.f32.gmra.mrb[0].mxu0 %v532
    %v605 = vpop.f32.mrb[0].mxu0
    %v606 = vadd.f32 %v537, %v605
    %v607 = vpop.f32.mrb[0].mxu0
    %608 = vdwg.mxu0
    %v609 = vld [vmem:[#allocation13] sm:$0xff]
    %v610 = vld [vmem:[#allocation13 + $0x8] sm:$0xff]
    %v611 = vld [vmem:[#allocation13 + $0x10] sm:$0xff]
    %v612 = vld [vmem:[#allocation13 + $0x18] sm:$0xff]
    %v613 = vld [vmem:[#allocation13 + $0x20] sm:$0xff]
    %v614 = vld [vmem:[#allocation13 + $0x28] sm:$0xff]
    %v615 = vld [vmem:[#allocation13 + $0x30] sm:$0xff]
    %v616 = vld [vmem:[#allocation13 + $0x38] sm:$0xff]
    %v617 = vld [vmem:[#allocation13 + $0x40] sm:$0xff]
    %v618 = vld [vmem:[#allocation13 + $0x48] sm:$0xff]
    %v619 = vld [vmem:[#allocation13 + $0x50] sm:$0xff]
    %v620 = vld [vmem:[#allocation13 + $0x58] sm:$0xff]
    %v621 = vld [vmem:[#allocation13 + $0x60] sm:$0xff]
    %v622 = vld [vmem:[#allocation13 + $0x68] sm:$0xff]
    %v623 = vld [vmem:[#allocation13 + $0x70] sm:$0xff]
    %v624 = vld [vmem:[#allocation13 + $0x78] sm:$0xff]
    %v625 = vld [vmem:[%s12] sm:$0x1]
    %v626 = vmax.f32 %v606, 0.0
    %v628 = vlaneseq
    %v629 = vshrl.u32 %v628, 7
    %v630 = vsub.s32 0, %v629
    %v631 = vrot.slane %v625, %v630
    %633 = vmatprep.subr.mxu0 0.0
    %634 = vmatpush1.msra.mxu0 %v609
    %635 = vmatprep.subr.mxu0 0.0
    %636 = vmatpush1.msra.mxu0 %v610
    %637 = vmatprep.subr.mxu0 0.0
    %638 = vmatpush1.msra.mxu0 %v611
    %639 = vmatprep.subr.mxu0 0.0
    %640 = vmatpush1.msra.mxu0 %v612
    %641 = vmatprep.subr.mxu0 0.0
    %642 = vmatpush1.msra.mxu0 %v613
    %643 = vmatprep.subr.mxu0 0.0
    %644 = vmatpush1.msra.mxu0 %v614
    %645 = vmatprep.subr.mxu0 0.0
    %646 = vmatpush1.msra.mxu0 %v615
    %647 = vmatprep.subr.mxu0 0.0
    %648 = vmatpush1.msra.mxu0 %v616
    %649 = vmatprep.subr.mxu0 0.0
    %650 = vmatpush1.msra.mxu0 %v617
    %651 = vmatprep.subr.mxu0 0.0
    %652 = vmatpush1.msra.mxu0 %v618
    %653 = vmatprep.subr.mxu0 0.0
    %654 = vmatpush1.msra.mxu0 %v619
    %655 = vmatprep.subr.mxu0 0.0
    %656 = vmatpush1.msra.mxu0 %v620
    %657 = vmatprep.subr.mxu0 0.0
    %658 = vmatpush1.msra.mxu0 %v621
    %659 = vmatprep.subr.mxu0 0.0
    %660 = vmatpush1.msra.mxu0 %v622
    %661 = vmatprep.subr.mxu0 0.0
    %662 = vmatpush1.msra.mxu0 %v623
    %663 = vmatprep.subr.mxu0 0.0
    %664 = vmatpush1.msra.mxu0 %v624
    %665 = vmatprep.subr.mxu0 0.0
    %666 = vmatpush1.msra.mxu0 0.0
    %667 = vmatprep.subr.mxu0 0.0
    %668 = vmatpush1.msra.mxu0 0.0
    %669 = vmatprep.subr.mxu0 0.0
    %670 = vmatpush1.msra.mxu0 0.0
    %671 = vmatprep.subr.mxu0 0.0
    %672 = vmatpush1.msra.mxu0 0.0
    %673 = vmatprep.subr.mxu0 0.0
    %674 = vmatpush1.msra.mxu0 0.0
    %675 = vmatprep.subr.mxu0 0.0
    %676 = vmatpush1.msra.mxu0 0.0
    %677 = vmatprep.subr.mxu0 0.0
    %678 = vmatpush1.msra.mxu0 0.0
    %679 = vmatprep.subr.mxu0 0.0
    %680 = vmatpush1.msra.mxu0 0.0
    %681 = vmatprep.subr.mxu0 0.0
    %682 = vmatpush1.msra.mxu0 0.0
    %683 = vmatprep.subr.mxu0 0.0
    %684 = vmatpush1.msra.mxu0 0.0
    %685 = vmatprep.subr.mxu0 0.0
    %686 = vmatpush1.msra.mxu0 0.0
    %687 = vmatprep.subr.mxu0 0.0
    %688 = vmatpush1.msra.mxu0 0.0
    %689 = vmatprep.subr.mxu0 0.0
    %690 = vmatpush1.msra.mxu0 0.0
    %691 = vmatprep.subr.mxu0 0.0
    %692 = vmatpush1.msra.mxu0 0.0
    %693 = vmatprep.subr.mxu0 0.0
    %694 = vmatpush1.msra.mxu0 0.0
    %695 = vmatprep.subr.mxu0 0.0
    %696 = vmatpush1.msra.mxu0 0.0
    %697 = vmatprep.mubr.f32.mxu0 0.0
    %698 = vmatmul.mubr.f32.gmra.mrb[0].mxu0 %v626
    %v699 = vpop.f32.mrb[0].mxu0
    %v700 = vadd.f32 %v631, %v699
    %v701 = vpop.f32.mrb[0].mxu0
    %702 = vdwg.mxu0
    %703 = vst [vmem:[#allocation14] sm:$0xff] %v700
    // Predicated region
    $region82: #{tpu_custom_call.1} parent=1 // pred_check
      _
    $region83: #{tpu_custom_call.1} parent=1 // pred_check_branch
      %705 = sbr.rel (0) target = $region85
    $region84: #{tpu_custom_call.1} parent=1 // pred_region
      %s707 = ssub.s32 128, 128
      %708 = vsyncadd [#allocation4], %s707
      %s710 = sshll.u32 [#allocation14], 4
      %s711 = int_to_ptr.vmem [resolvable:$true] %s710
      %713 = dma.vmem_to_hbm [thread:$0]  %s711, 128, %s13, [#allocation4]
    $region85: #{tpu_custom_call.1} parent=1 // pred_fallthru
      _
    // Predicated region
    $region86: #{tpu_custom_call.1} parent=1 // pred_check
      _
    $region87: #{tpu_custom_call.1} parent=1 // pred_check_branch
      %715 = sbr.rel (0) target = $region89
    $region88: #{tpu_custom_call.1} parent=1 // pred_region
      %716 = dma.done [#allocation4], 128
    $region89: #{tpu_custom_call.1} parent=1 // pred_fallthru
      _
    %717 = vsyncpa [#allocation3], 1
    %718 = vsyncpa [#allocation6], 1
    %719 = vsyncpa [#allocation9], 1
    %720 = vsyncpa [#allocation12], 1
    %721 = vsyncpa [#allocation4], 1

</llo_original>
